<compile_context>
chip_gen: v6e
topology: v6e:2x2x1
jax: 0.10.0
libtpu: 0.0.40
codegen_flags: <defaults>
</compile_context>

<pallas_src>
import math

import jax
import jax.numpy as jnp
from jax.experimental import pallas as pl
from jax.experimental.pallas import tpu as pltpu

LANE = 128


def _rup(d, m=LANE):
    """Round d up to a multiple of m (lane-dense padding)."""
    return ((d + m - 1) // m) * m


# ----------------------------- Fused Pallas kernel ---------------------------

def _make_fused_kernel(n_enc, n_dec, mid_pad):
    """Build the fused kernel, closed over static layer counts and padded latent width."""
    n_layers = n_enc + n_dec

    def kernel(*refs):
        x_ref, eps_ref = refs[0], refs[1]
        wb = refs[2:2 + 2 * n_layers]                 # interleaved (w_bf16, b_f32) per layer
        recon_ref = refs[2 + 2 * n_layers]            # (B, out_pad)  VMEM, lane-dense
        kld_ref = refs[3 + 2 * n_layers]              # (1,)          SMEM scalar

        def linear(h, i):
            w = wb[2 * i][...]                        # bf16 (in_pad, out_pad)
            b = wb[2 * i + 1][...]                    # f32  (1, out_pad), broadcasts over B
            return jnp.dot(h.astype(jnp.bfloat16), w,
                           preferred_element_type=jnp.float32) + b

        # ---- encoder: Linear -> ReLU for all but the last layer --------------
        h = x_ref[...].astype(jnp.float32)
        for i in range(n_enc):
            h = linear(h, i)
            if i != n_enc - 1:
                h = jnp.maximum(h, 0.0)

        # ---- lane-aligned mu / logvar split (whole-vreg slices) ---------------
        mu = h[:, :mid_pad]
        logvar = h[:, mid_pad:2 * mid_pad]

        # ---- reparametrize: z = mu + exp(logvar/2) * eps ----------------------
        std = jnp.exp(0.5 * logvar)                   # single exp; reuse std*std for KL
        z = mu + std * eps_ref[...]

        # ---- KL: total_kld = (1/B) * sum(-0.5*(1 + logvar - mu^2 - exp(logvar)))
        # Padded lanes contribute exactly 0 (logvar=0, mu=0 -> -0.5*(1+0-0-1)=0).
        klds = -0.5 * (1.0 + logvar - mu * mu - std * std)
        kld_ref[0] = jnp.sum(klds) * (1.0 / klds.shape[0])

        # ---- decoder: Linear -> ReLU after EVERY layer ------------------------
        h = z
        for i in range(n_dec):
            h = jnp.maximum(linear(h, n_enc + i), 0.0)

        recon_ref[...] = h.astype(recon_ref.dtype)

    return kernel


def _build_forward(kernel, n_params, mid, mid_pad, out_pad, emb):
    """Jitted forward wrapper (traced/lowered once, then cached)."""

    def fwd(x, eps, params):
        batch = x.shape[0]
        eps_pad = jnp.pad(eps.astype(jnp.float32), ((0, 0), (0, mid_pad - mid)))
        recon_pad, total_kld = pl.pallas_call(
            kernel,
            out_shape=(
                jax.ShapeDtypeStruct((batch, out_pad), x.dtype),
                jax.ShapeDtypeStruct((1,), jnp.float32),
            ),
            in_specs=[pl.BlockSpec(memory_space=pltpu.MemorySpace.VMEM)] * (2 + n_params),
            out_specs=(
                pl.BlockSpec(memory_space=pltpu.MemorySpace.VMEM),
                pl.BlockSpec(memory_space=pltpu.MemorySpace.SMEM),
            ),
        )(x, eps_pad, *params)
        # Strip lane padding (one cheap XLA slice, fused by jit).
        return recon_pad[:, :emb], total_kld

    return jax.jit(fwd)


# ----------------------------- BetaVAE_H model -------------------------------

class BetaVAEH:
    def __init__(self, embedding_size, hidden_size_list, mid_hidden, key):
        self.embedding_size = embedding_size
        self.hidden_size_list = list(hidden_size_list)
        self.mid_hidden = mid_hidden
        self.mid_pad = _rup(mid_hidden)

        enc_sizes = [embedding_size] + self.hidden_size_list + [mid_hidden * 2]
        dec_sizes = [embedding_size] + self.hidden_size_list + [mid_hidden]

        # encoder layers: enc_sizes[i] -> enc_sizes[i+1]
        enc_shapes = [(enc_sizes[i], enc_sizes[i + 1]) for i in range(len(enc_sizes) - 1)]
        # decoder layers (reverse order): dec_sizes[i] -> dec_sizes[i-1], i = last..1
        dec_shapes = [(dec_sizes[i], dec_sizes[i - 1]) for i in range(len(dec_sizes) - 1, 0, -1)]
        self.n_enc = len(enc_shapes)
        self.n_dec = len(dec_shapes)

        def kaiming(k, fan_in, fan_out):
            # kaiming_normal, fan_in mode: std = sqrt(2 / fan_in). W stored [in, out]
            # so y = x @ W + b matches PyTorch's x @ W_pt.T + b_pt.
            std = math.sqrt(2.0 / fan_in)
            return jax.random.normal(k, (fan_in, fan_out), jnp.float32) * std

        shapes = enc_shapes + dec_shapes
        keys = jax.random.split(key, len(shapes))
        raw = [(kaiming(k, fi, fo), jnp.zeros((fo,), jnp.float32))
               for k, (fi, fo) in zip(keys, shapes)]

        # Zero-pad weights/biases so every activation is lane-dense (width multiple of 128).
        # The last encoder layer is padded so mu lives in lanes [0, mid_pad) and logvar in
        # [mid_pad, 2*mid_pad) -- whole-vreg aligned split.  Zero-padded rows/cols contribute
        # exactly 0, so results are exact.
        mid = mid_hidden
        mid_pad = self.mid_pad
        self.flat_params = []
        for li, ((fi, fo), (w, b)) in enumerate(zip(shapes, raw)):
            in_pad = fi if li == 0 else _rup(fi)      # first encoder layer keeps natural K
            if li == self.n_enc - 1:
                # last encoder layer: split mu / logvar into separate 128-aligned lane groups
                out_pad = 2 * mid_pad
                w_pad = jnp.zeros((in_pad, out_pad), jnp.float32)
                w_pad = w_pad.at[:fi, :mid].set(w[:, :mid])
                w_pad = w_pad.at[:fi, mid_pad:mid_pad + mid].set(w[:, mid:])
                b_pad = jnp.zeros((1, out_pad), jnp.float32)
                b_pad = b_pad.at[0, :mid].set(b[:mid])
                b_pad = b_pad.at[0, mid_pad:mid_pad + mid].set(b[mid:])
            else:
                out_pad = _rup(fo)
                w_pad = jnp.zeros((in_pad, out_pad), jnp.float32).at[:fi, :fo].set(w)
                b_pad = jnp.zeros((1, out_pad), jnp.float32).at[0, :fo].set(b)
            # Weights bf16 (MXU-native, half the DMA bytes); biases stay f32.
            self.flat_params += [w_pad.astype(jnp.bfloat16), b_pad]

        self.out_pad = _rup(dec_shapes[-1][1])        # padded reconstruction width
        self._kernel = _make_fused_kernel(self.n_enc, self.n_dec, mid_pad)
        self._forward = _build_forward(self._kernel, len(self.flat_params),
                                       mid, mid_pad, self.out_pad, embedding_size)

    def forward(self, x, eps):
        # total_kld has shape (1,) like the PyTorch reference.
        return self._forward(x, eps, self.flat_params)


# ----------------------------- Main ------------------------------------------

if __name__ == "__main__":
    key = jax.random.PRNGKey(0)
    k_param, k_x, k_eps = jax.random.split(key, 3)

    batch = 8
    embedding_size = 32
    hidden_size_list = [64, 32]
    mid_hidden = 16

    model = BetaVAEH(embedding_size, hidden_size_list, mid_hidden, k_param)

    x = jax.random.normal(k_x, (batch, embedding_size), jnp.float32)
    # eps generated in plain JAX for deterministic parity; reparametrize math is in-kernel.
    eps = jax.random.normal(k_eps, (batch, mid_hidden), jnp.float32)

    x_recon, total_kld = model.forward(x, eps)
    jax.block_until_ready(x_recon)
    jax.block_until_ready(total_kld)

    assert x_recon.shape == (batch, embedding_size)
    assert total_kld.shape == (1,)
    assert jnp.all(jnp.isfinite(x_recon)) and jnp.all(jnp.isfinite(total_kld))

    # Second call exercises the cached jitted executable (no retrace).
    x_recon2, total_kld2 = model.forward(x, eps)
    jax.block_until_ready(x_recon2)

    print("KERNEL_OK")
</pallas_src>

<mosaic_0001>
module attributes {stable_mosaic.version = 11 : i64} {
  func.func @kernel(%arg0: memref<8x32xf32, #tpu.memory_space<vmem>>, %arg1: memref<8x128xf32, #tpu.memory_space<vmem>>, %arg2: memref<32x128xbf16, #tpu.memory_space<vmem>>, %arg3: memref<1x128xf32, #tpu.memory_space<vmem>>, %arg4: memref<128x128xbf16, #tpu.memory_space<vmem>>, %arg5: memref<1x128xf32, #tpu.memory_space<vmem>>, %arg6: memref<128x256xbf16, #tpu.memory_space<vmem>>, %arg7: memref<1x256xf32, #tpu.memory_space<vmem>>, %arg8: memref<128x128xbf16, #tpu.memory_space<vmem>>, %arg9: memref<1x128xf32, #tpu.memory_space<vmem>>, %arg10: memref<128x128xbf16, #tpu.memory_space<vmem>>, %arg11: memref<1x128xf32, #tpu.memory_space<vmem>>, %arg12: memref<128x128xbf16, #tpu.memory_space<vmem>>, %arg13: memref<1x128xf32, #tpu.memory_space<vmem>>, %arg14: memref<8x128xf32, #tpu.memory_space<vmem>>, %arg15: memref<1xf32, #tpu.memory_space<smem>>) attributes {dimension_semantics = [], scalar_prefetch = 0 : i64, scratch_operands = 0 : i64, tpu.core_type = #tpu.core_type<tc>} {
    %c0 = arith.constant 0 : index
    %c0_0 = arith.constant 0 : index
    %0 = vector.load %arg0[%c0, %c0_0] : memref<8x32xf32, #tpu.memory_space<vmem>>, vector<8x32xf32>
    %c0_1 = arith.constant 0 : index
    %c0_2 = arith.constant 0 : index
    %1 = vector.load %arg2[%c0_1, %c0_2] : memref<32x128xbf16, #tpu.memory_space<vmem>>, vector<32x128xbf16>
    %c0_3 = arith.constant 0 : index
    %c0_4 = arith.constant 0 : index
    %2 = vector.load %arg3[%c0_3, %c0_4] : memref<1x128xf32, #tpu.memory_space<vmem>>, vector<1x128xf32>
    %3 = arith.truncf %0 : vector<8x32xf32> to vector<8x32xbf16>
    %cst = arith.constant dense<0.000000e+00> : vector<8x128xf32>
    %4 = tpu.matmul %3, %1, %cst {dimension_numbers = #tpu.dot_dimension_numbers<[1], [0], [0], [1], [0, 0, 1, 1], [], []>} : vector<8x32xbf16>, vector<32x128xbf16>, vector<8x128xf32> -> vector<8x128xf32>
    %5 = vector.broadcast %2 : vector<1x128xf32> to vector<8x128xf32>
    %6 = arith.addf %4, %5 : vector<8x128xf32>
    %cst_5 = arith.constant 0.000000e+00 : f32
    %7 = vector.broadcast %cst_5 : f32 to vector<8x128xf32>
    %8 = arith.maximumf %6, %7 : vector<8x128xf32>
    %c0_6 = arith.constant 0 : index
    %c0_7 = arith.constant 0 : index
    %9 = vector.load %arg4[%c0_6, %c0_7] : memref<128x128xbf16, #tpu.memory_space<vmem>>, vector<128x128xbf16>
    %c0_8 = arith.constant 0 : index
    %c0_9 = arith.constant 0 : index
    %10 = vector.load %arg5[%c0_8, %c0_9] : memref<1x128xf32, #tpu.memory_space<vmem>>, vector<1x128xf32>
    %11 = arith.truncf %8 : vector<8x128xf32> to vector<8x128xbf16>
    %cst_10 = arith.constant dense<0.000000e+00> : vector<8x128xf32>
    %12 = tpu.matmul %11, %9, %cst_10 {dimension_numbers = #tpu.dot_dimension_numbers<[1], [0], [0], [1], [0, 0, 1, 1], [], []>} : vector<8x128xbf16>, vector<128x128xbf16>, vector<8x128xf32> -> vector<8x128xf32>
    %13 = vector.broadcast %10 : vector<1x128xf32> to vector<8x128xf32>
    %14 = arith.addf %12, %13 : vector<8x128xf32>
    %cst_11 = arith.constant 0.000000e+00 : f32
    %15 = vector.broadcast %cst_11 : f32 to vector<8x128xf32>
    %16 = arith.maximumf %14, %15 : vector<8x128xf32>
    %c0_12 = arith.constant 0 : index
    %c0_13 = arith.constant 0 : index
    %17 = vector.load %arg6[%c0_12, %c0_13] : memref<128x256xbf16, #tpu.memory_space<vmem>>, vector<128x256xbf16>
    %c0_14 = arith.constant 0 : index
    %c0_15 = arith.constant 0 : index
    %18 = vector.load %arg7[%c0_14, %c0_15] : memref<1x256xf32, #tpu.memory_space<vmem>>, vector<1x256xf32>
    %19 = arith.truncf %16 : vector<8x128xf32> to vector<8x128xbf16>
    %cst_16 = arith.constant dense<0.000000e+00> : vector<8x256xf32>
    %20 = tpu.matmul %19, %17, %cst_16 {dimension_numbers = #tpu.dot_dimension_numbers<[1], [0], [0], [1], [0, 0, 1, 1], [], []>} : vector<8x128xbf16>, vector<128x256xbf16>, vector<8x256xf32> -> vector<8x256xf32>
    %21 = vector.broadcast %18 : vector<1x256xf32> to vector<8x256xf32>
    %22 = arith.addf %20, %21 : vector<8x256xf32>
    %23 = vector.extract_strided_slice %22 {offsets = [0, 0], sizes = [8, 128], strides = [1, 1]} : vector<8x256xf32> to vector<8x128xf32>
    %24 = vector.extract_strided_slice %22 {offsets = [0, 128], sizes = [8, 128], strides = [1, 1]} : vector<8x256xf32> to vector<8x128xf32>
    %cst_17 = arith.constant 5.000000e-01 : f32
    %25 = vector.broadcast %cst_17 : f32 to vector<8x128xf32>
    %26 = arith.mulf %25, %24 : vector<8x128xf32>
    %27 = math.exp %26 : vector<8x128xf32>
    %c0_18 = arith.constant 0 : index
    %c0_19 = arith.constant 0 : index
    %28 = vector.load %arg1[%c0_18, %c0_19] : memref<8x128xf32, #tpu.memory_space<vmem>>, vector<8x128xf32>
    %29 = arith.mulf %27, %28 : vector<8x128xf32>
    %30 = arith.addf %23, %29 : vector<8x128xf32>
    %cst_20 = arith.constant 1.000000e+00 : f32
    %31 = vector.broadcast %cst_20 : f32 to vector<8x128xf32>
    %32 = arith.addf %31, %24 : vector<8x128xf32>
    %33 = arith.mulf %23, %23 : vector<8x128xf32>
    %34 = arith.subf %32, %33 : vector<8x128xf32>
    %35 = arith.mulf %27, %27 : vector<8x128xf32>
    %36 = arith.subf %34, %35 : vector<8x128xf32>
    %cst_21 = arith.constant -5.000000e-01 : f32
    %37 = vector.broadcast %cst_21 : f32 to vector<8x128xf32>
    %38 = arith.mulf %37, %36 : vector<8x128xf32>
    %39 = vector.shape_cast %38 : vector<8x128xf32> to vector<1x8x128xf32>
    %cst_22 = arith.constant dense<0.000000e+00> : vector<1xf32>
    %40 = vector.multi_reduction <add>, %39, %cst_22 [1, 2] : vector<1x8x128xf32> to vector<1xf32>
    %41 = vector.shape_cast %40 : vector<1xf32> to vector<1x1x1xf32>
    %42 = vector.extract %41[0, 0, 0] : f32 from vector<1x1x1xf32>
    %cst_23 = arith.constant 1.250000e-01 : f32
    %43 = arith.mulf %42, %cst_23 : f32
    %c0_24 = arith.constant 0 : index
    %44 = memref.load %arg15[%c0_24] : memref<1xf32, #tpu.memory_space<smem>>
    memref.store %43, %arg15[%c0_24] : memref<1xf32, #tpu.memory_space<smem>>
    %c0_25 = arith.constant 0 : index
    %c0_26 = arith.constant 0 : index
    %45 = vector.load %arg8[%c0_25, %c0_26] : memref<128x128xbf16, #tpu.memory_space<vmem>>, vector<128x128xbf16>
    %c0_27 = arith.constant 0 : index
    %c0_28 = arith.constant 0 : index
    %46 = vector.load %arg9[%c0_27, %c0_28] : memref<1x128xf32, #tpu.memory_space<vmem>>, vector<1x128xf32>
    %47 = arith.truncf %30 : vector<8x128xf32> to vector<8x128xbf16>
    %cst_29 = arith.constant dense<0.000000e+00> : vector<8x128xf32>
    %48 = tpu.matmul %47, %45, %cst_29 {dimension_numbers = #tpu.dot_dimension_numbers<[1], [0], [0], [1], [0, 0, 1, 1], [], []>} : vector<8x128xbf16>, vector<128x128xbf16>, vector<8x128xf32> -> vector<8x128xf32>
    %49 = vector.broadcast %46 : vector<1x128xf32> to vector<8x128xf32>
    %50 = arith.addf %48, %49 : vector<8x128xf32>
    %cst_30 = arith.constant 0.000000e+00 : f32
    %51 = vector.broadcast %cst_30 : f32 to vector<8x128xf32>
    %52 = arith.maximumf %50, %51 : vector<8x128xf32>
    %c0_31 = arith.constant 0 : index
    %c0_32 = arith.constant 0 : index
    %53 = vector.load %arg10[%c0_31, %c0_32] : memref<128x128xbf16, #tpu.memory_space<vmem>>, vector<128x128xbf16>
    %c0_33 = arith.constant 0 : index
    %c0_34 = arith.constant 0 : index
    %54 = vector.load %arg11[%c0_33, %c0_34] : memref<1x128xf32, #tpu.memory_space<vmem>>, vector<1x128xf32>
    %55 = arith.truncf %52 : vector<8x128xf32> to vector<8x128xbf16>
    %cst_35 = arith.constant dense<0.000000e+00> : vector<8x128xf32>
    %56 = tpu.matmul %55, %53, %cst_35 {dimension_numbers = #tpu.dot_dimension_numbers<[1], [0], [0], [1], [0, 0, 1, 1], [], []>} : vector<8x128xbf16>, vector<128x128xbf16>, vector<8x128xf32> -> vector<8x128xf32>
    %57 = vector.broadcast %54 : vector<1x128xf32> to vector<8x128xf32>
    %58 = arith.addf %56, %57 : vector<8x128xf32>
    %cst_36 = arith.constant 0.000000e+00 : f32
    %59 = vector.broadcast %cst_36 : f32 to vector<8x128xf32>
    %60 = arith.maximumf %58, %59 : vector<8x128xf32>
    %c0_37 = arith.constant 0 : index
    %c0_38 = arith.constant 0 : index
    %61 = vector.load %arg12[%c0_37, %c0_38] : memref<128x128xbf16, #tpu.memory_space<vmem>>, vector<128x128xbf16>
    %c0_39 = arith.constant 0 : index
    %c0_40 = arith.constant 0 : index
    %62 = vector.load %arg13[%c0_39, %c0_40] : memref<1x128xf32, #tpu.memory_space<vmem>>, vector<1x128xf32>
    %63 = arith.truncf %60 : vector<8x128xf32> to vector<8x128xbf16>
    %cst_41 = arith.constant dense<0.000000e+00> : vector<8x128xf32>
    %64 = tpu.matmul %63, %61, %cst_41 {dimension_numbers = #tpu.dot_dimension_numbers<[1], [0], [0], [1], [0, 0, 1, 1], [], []>} : vector<8x128xbf16>, vector<128x128xbf16>, vector<8x128xf32> -> vector<8x128xf32>
    %65 = vector.broadcast %62 : vector<1x128xf32> to vector<8x128xf32>
    %66 = arith.addf %64, %65 : vector<8x128xf32>
    %cst_42 = arith.constant 0.000000e+00 : f32
    %67 = vector.broadcast %cst_42 : f32 to vector<8x128xf32>
    %68 = arith.maximumf %66, %67 : vector<8x128xf32>
    %c0_43 = arith.constant 0 : index
    %c0_44 = arith.constant 0 : index
    %69 = vector.load %arg14[%c0_43, %c0_44] : memref<8x128xf32, #tpu.memory_space<vmem>>, vector<8x128xf32>
    tpu.vector_store %arg14[%c0_43, %c0_44], %68 {strides = array<i32>} : memref<8x128xf32, #tpu.memory_space<vmem>>, vector<8x128xf32>,
    return
  }
}

</mosaic_0001>

<llo_original>
// kernel: fwd.1
$region0: #{fwd.1}
  #allocation0 [shape = 'u32[]', space=smem, size = 0x4, offset = 0x4, fixed_abs, tag = 'smem constant byte address 0x4 - core index']
  #allocation1 [shape = 'u32[144,128]{1,0:T(1,128)}', space=vmem, size = 0x12000, scoped, tag = 'internal scratch']
  %s0 = inlined_call_operand.hbm [shape: f32[8,32], index: 0, kind: input, shape index: {}]
  %s1 = inlined_call_operand.vmem [shape: f32[8,128], index: 1, kind: input, shape index: {}]
  %s2 = inlined_call_operand.vmem [shape: bf16[32,128], index: 2, kind: input, shape index: {}]
  %s3 = inlined_call_operand.vmem [shape: f32[1,128], index: 3, kind: input, shape index: {}]
  %s4 = inlined_call_operand.hbm [shape: bf16[128,128], index: 4, kind: input, shape index: {}]
  %s5 = inlined_call_operand.vmem [shape: f32[1,128], index: 5, kind: input, shape index: {}]
  %s6 = inlined_call_operand.hbm [shape: bf16[128,256], index: 6, kind: input, shape index: {}]
  %s7 = inlined_call_operand.vmem [shape: f32[1,256], index: 7, kind: input, shape index: {}]
  %s8 = inlined_call_operand.hbm [shape: bf16[128,128], index: 8, kind: input, shape index: {}]
  %s9 = inlined_call_operand.vmem [shape: f32[1,128], index: 9, kind: input, shape index: {}]
  %s10 = inlined_call_operand.hbm [shape: bf16[128,128], index: 10, kind: input, shape index: {}]
  %s11 = inlined_call_operand.vmem [shape: f32[1,128], index: 11, kind: input, shape index: {}]
  %s12 = inlined_call_operand.hbm [shape: bf16[128,128], index: 12, kind: input, shape index: {}]
  %s13 = inlined_call_operand.vmem [shape: f32[1,128], index: 13, kind: input, shape index: {}]
  %s14 = inlined_call_operand.hbm [shape: f32[8,128], index: 14, kind: output, shape index: {0}]
  %s15 = inlined_call_operand.hbm [shape: f32[1], index: 15, kind: output, shape index: {1}]
  %16 = xla_tuple %s14, %s15
  %s17 = sld [smem:[#allocation0]]
  $region98: #{fwd.1} parent=0
    _
  %s19 = ssub.s32 1, %s17
  %s20 = scalar_select 0, %s19, %s17
  $region1: #{fwd.1} parent=0
    #allocation2 [shape = 'u8[4096]{0}', space=vmem, size = 0x1000, scoped, tag = 'input window, operand 0, single buffered']
    #allocation3 [shape = 's32[1]{0}', space=sflag, size = 0x4, scoped, tag = 'scoped memory for fwd.1']
    #allocation4 [shape = 's32[1]{0}', space=sflag, size = 0x4, scoped, tag = 'scoped memory for fwd.1']
    #allocation5 [shape = 's32[1]{0}', space=sflag, size = 0x4, scoped, tag = 'scoped memory for fwd.1']
    #allocation6 [shape = 'u8[32768]{0}', space=vmem, size = 0x8000, scoped, tag = 'input window, operand 4, single buffered']
    #allocation7 [shape = 's32[1]{0}', space=sflag, size = 0x4, scoped, tag = 'scoped memory for fwd.1']
    #allocation8 [shape = 'u8[65536]{0}', space=vmem, size = 0x10000, scoped, tag = 'input window, operand 6, single buffered']
    #allocation9 [shape = 'u8[32768]{0}', space=vmem, size = 0x8000, scoped, tag = 'input window, operand 8, single buffered']
    #allocation10 [shape = 's32[1]{0}', space=sflag, size = 0x4, scoped, tag = 'scoped memory for fwd.1']
    #allocation11 [shape = 'u8[32768]{0}', space=vmem, size = 0x8000, scoped, tag = 'input window, operand 10, single buffered']
    #allocation12 [shape = 'u8[32768]{0}', space=vmem, size = 0x8000, scoped, tag = 'input window, operand 12, single buffered']
    #allocation13 [shape = 's32[1]{0}', space=sflag, size = 0x4, scoped, tag = 'scoped memory for fwd.1']
    #allocation14 [shape = 'u8[4096]{0}', space=vmem, size = 0x1000, scoped, tag = 'output window, operand 0, single buffered']
    #allocation15 [shape = 'u8[512]{0}', space=smem, size = 0x200, scoped, tag = 'output window, operand 1, single buffered']
    %21 = vsyncpa [#allocation3], 0
    %22 = vsyncpa [#allocation7], 0
    %23 = vsyncpa [#allocation10], 0
    %24 = vsyncpa [#allocation13], 0
    %25 = vsyncpa [#allocation4], 0
    %26 = vsyncpa [#allocation5], 0
    // Predicated region
    $region2: #{fwd.1} parent=1 // pred_check
      _
    $region3: #{fwd.1} parent=1 // pred_check_branch
      %28 = sbr.rel (0) target = $region5
    $region4: #{fwd.1} parent=1 // pred_region
      %s30 = ssub.s32 128, 128
      %31 = vsyncadd [#allocation3], %s30
      %s33 = sshll.u32 [#allocation2], 4
      %s34 = int_to_ptr.vmem [resolvable:$true] %s33
      %36 = dma.hbm_to_vmem [thread:$0]  %s0, 128, %s34, [#allocation3]
    $region5: #{fwd.1} parent=1 // pred_fallthru
      _
    // Predicated region
    $region6: #{fwd.1} parent=1 // pred_check
      _
    $region7: #{fwd.1} parent=1 // pred_check_branch
      %38 = sbr.rel (0) target = $region9
    $region8: #{fwd.1} parent=1 // pred_region
      _
    $region9: #{fwd.1} parent=1 // pred_fallthru
      _
    // Predicated region
    $region10: #{fwd.1} parent=1 // pred_check
      _
    $region11: #{fwd.1} parent=1 // pred_check_branch
      %40 = sbr.rel (0) target = $region13
    $region12: #{fwd.1} parent=1 // pred_region
      _
    $region13: #{fwd.1} parent=1 // pred_fallthru
      _
    // Predicated region
    $region14: #{fwd.1} parent=1 // pred_check
      _
    $region15: #{fwd.1} parent=1 // pred_check_branch
      %42 = sbr.rel (0) target = $region17
    $region16: #{fwd.1} parent=1 // pred_region
      _
    $region17: #{fwd.1} parent=1 // pred_fallthru
      _
    // Predicated region
    $region18: #{fwd.1} parent=1 // pred_check
      _
    $region19: #{fwd.1} parent=1 // pred_check_branch
      %44 = sbr.rel (0) target = $region21
    $region20: #{fwd.1} parent=1 // pred_region
      %s46 = ssub.s32 1024, 1024
      %47 = vsyncadd [#allocation7], %s46
      %s48 = sshll.u32 [#allocation6], 4
      %s49 = int_to_ptr.vmem [resolvable:$true] %s48
      %54 = dma.hbm_to_vmem [thread:$0]  %s4, 1024, %s49, [#allocation7], 64, 64, 4
    $region21: #{fwd.1} parent=1 // pred_fallthru
      _
    // Predicated region
    $region22: #{fwd.1} parent=1 // pred_check
      _
    $region23: #{fwd.1} parent=1 // pred_check_branch
      %56 = sbr.rel (0) target = $region25
    $region24: #{fwd.1} parent=1 // pred_region
      _
    $region25: #{fwd.1} parent=1 // pred_fallthru
      _
    // Predicated region
    $region26: #{fwd.1} parent=1 // pred_check
      _
    $region27: #{fwd.1} parent=1 // pred_check_branch
      %58 = sbr.rel (0) target = $region29
    $region28: #{fwd.1} parent=1 // pred_region
      %s60 = ssub.s32 2048, 2048
      %61 = vsyncadd [#allocation7], %s60
      %s62 = sshll.u32 [#allocation8], 4
      %s63 = int_to_ptr.vmem [resolvable:$true] %s62
      %68 = dma.hbm_to_vmem [thread:$0]  %s6, 2048, %s63, [#allocation7], 128, 128, 8
    $region29: #{fwd.1} parent=1 // pred_fallthru
      _
    // Predicated region
    $region30: #{fwd.1} parent=1 // pred_check
      _
    $region31: #{fwd.1} parent=1 // pred_check_branch
      %70 = sbr.rel (0) target = $region33
    $region32: #{fwd.1} parent=1 // pred_region
      _
    $region33: #{fwd.1} parent=1 // pred_fallthru
      _
    // Predicated region
    $region34: #{fwd.1} parent=1 // pred_check
      _
    $region35: #{fwd.1} parent=1 // pred_check_branch
      %72 = sbr.rel (0) target = $region37
    $region36: #{fwd.1} parent=1 // pred_region
      %s74 = ssub.s32 1024, 1024
      %75 = vsyncadd [#allocation10], %s74
      %s76 = sshll.u32 [#allocation9], 4
      %s77 = int_to_ptr.vmem [resolvable:$true] %s76
      %82 = dma.hbm_to_vmem [thread:$0]  %s8, 1024, %s77, [#allocation10], 64, 64, 4
    $region37: #{fwd.1} parent=1 // pred_fallthru
      _
    // Predicated region
    $region38: #{fwd.1} parent=1 // pred_check
      _
    $region39: #{fwd.1} parent=1 // pred_check_branch
      %84 = sbr.rel (0) target = $region41
    $region40: #{fwd.1} parent=1 // pred_region
      _
    $region41: #{fwd.1} parent=1 // pred_fallthru
      _
    // Predicated region
    $region42: #{fwd.1} parent=1 // pred_check
      _
    $region43: #{fwd.1} parent=1 // pred_check_branch
      %86 = sbr.rel (0) target = $region45
    $region44: #{fwd.1} parent=1 // pred_region
      %s88 = ssub.s32 1024, 1024
      %89 = vsyncadd [#allocation10], %s88
      %s90 = sshll.u32 [#allocation11], 4
      %s91 = int_to_ptr.vmem [resolvable:$true] %s90
      %96 = dma.hbm_to_vmem [thread:$0]  %s10, 1024, %s91, [#allocation10], 64, 64, 4
    $region45: #{fwd.1} parent=1 // pred_fallthru
      _
    // Predicated region
    $region46: #{fwd.1} parent=1 // pred_check
      _
    $region47: #{fwd.1} parent=1 // pred_check_branch
      %98 = sbr.rel (0) target = $region49
    $region48: #{fwd.1} parent=1 // pred_region
      _
    $region49: #{fwd.1} parent=1 // pred_fallthru
      _
    // Predicated region
    $region50: #{fwd.1} parent=1 // pred_check
      _
    $region51: #{fwd.1} parent=1 // pred_check_branch
      %100 = sbr.rel (0) target = $region53
    $region52: #{fwd.1} parent=1 // pred_region
      %s102 = ssub.s32 1024, 1024
      %103 = vsyncadd [#allocation13], %s102
      %s104 = sshll.u32 [#allocation12], 4
      %s105 = int_to_ptr.vmem [resolvable:$true] %s104
      %110 = dma.hbm_to_vmem [thread:$0]  %s12, 1024, %s105, [#allocation13], 64, 64, 4
    $region53: #{fwd.1} parent=1 // pred_fallthru
      _
    // Predicated region
    $region54: #{fwd.1} parent=1 // pred_check
      _
    $region55: #{fwd.1} parent=1 // pred_check_branch
      %112 = sbr.rel (0) target = $region57
    $region56: #{fwd.1} parent=1 // pred_region
      _
    $region57: #{fwd.1} parent=1 // pred_fallthru
      _
    // Predicated region
    $region58: #{fwd.1} parent=1 // pred_check
      _
    $region59: #{fwd.1} parent=1 // pred_check_branch
      %114 = sbr.rel (0) target = $region61
    $region60: #{fwd.1} parent=1 // pred_region
      %115 = dma.done [#allocation3], 128
    $region61: #{fwd.1} parent=1 // pred_fallthru
      _
    // Predicated region
    $region62: #{fwd.1} parent=1 // pred_check
      _
    $region63: #{fwd.1} parent=1 // pred_check_branch
      %117 = sbr.rel (0) target = $region65
    $region64: #{fwd.1} parent=1 // pred_region
      %118 = dma.done [#allocation7], 1024
    $region65: #{fwd.1} parent=1 // pred_fallthru
      _
    // Predicated region
    $region66: #{fwd.1} parent=1 // pred_check
      _
    $region67: #{fwd.1} parent=1 // pred_check_branch
      %120 = sbr.rel (0) target = $region69
    $region68: #{fwd.1} parent=1 // pred_region
      %121 = dma.done [#allocation7], 2048
    $region69: #{fwd.1} parent=1 // pred_fallthru
      _
    // Predicated region
    $region70: #{fwd.1} parent=1 // pred_check
      _
    $region71: #{fwd.1} parent=1 // pred_check_branch
      %123 = sbr.rel (0) target = $region73
    $region72: #{fwd.1} parent=1 // pred_region
      %124 = dma.done [#allocation10], 1024
    $region73: #{fwd.1} parent=1 // pred_fallthru
      _
    // Predicated region
    $region74: #{fwd.1} parent=1 // pred_check
      _
    $region75: #{fwd.1} parent=1 // pred_check_branch
      %126 = sbr.rel (0) target = $region77
    $region76: #{fwd.1} parent=1 // pred_region
      %127 = dma.done [#allocation10], 1024
    $region77: #{fwd.1} parent=1 // pred_fallthru
      _
    // Predicated region
    $region78: #{fwd.1} parent=1 // pred_check
      _
    $region79: #{fwd.1} parent=1 // pred_check_branch
      %129 = sbr.rel (0) target = $region81
    $region80: #{fwd.1} parent=1 // pred_region
      %130 = dma.done [#allocation13], 1024
    $region81: #{fwd.1} parent=1 // pred_fallthru
      _
    %v132 = vld [vmem:[#allocation2] sm:$0xff]
    %v133 = vld [vmem:[%s2] sm:$0xf]
    %v134 = vld [vmem:[%s2 + $0x4] sm:$0xf]
    %v135 = vld [vmem:[%s2 + $0x8] sm:$0xf]
    %v136 = vld [vmem:[%s2 + $0xc] sm:$0xf]
    %v137 = vld [vmem:[%s3] sm:$0x1]
    %v138 = vpack.c.bf16 %v132, %v132
    %v140 = vlaneseq
    %v141 = vshrl.u32 %v140, 7
    %v142 = vsub.s32 0, %v141
    %v143 = vrot.slane %v137, %v142
    %v149 = vunpack.c.l.b16 %v133
    %v150 = vunpack.c.l.b16 %v134
    %v151 = vunpack.c.l.b16 %v135
    %v152 = vunpack.c.l.b16 %v136
    %v153 = vpack.c.b16 %v150, %v149
    %v154 = vpack.c.b16 %v152, %v151
    %vm157 = vcmask 261120
    %v159 = vsel %vm157, %v138, 0
    %161 = vmatprep.subr.bf16.mxu0 0
    %162 = vmatpush1.bf16.msra.mxu0 0
    %163 = vmatprep.subr.bf16.mxu0 0
    %164 = vmatpush1.bf16.msra.mxu0 0
    %165 = vmatprep.subr.bf16.mxu0 0
    %166 = vmatpush1.bf16.msra.mxu0 0
    %167 = vmatprep.subr.bf16.mxu0 0
    %168 = vmatpush1.bf16.msra.mxu0 0
    %169 = vmatprep.subr.bf16.mxu0 0
    %170 = vmatpush1.bf16.msra.mxu0 0
    %171 = vmatprep.subr.bf16.mxu0 0
    %172 = vmatpush1.bf16.msra.mxu0 0
    %173 = vmatprep.subr.bf16.mxu0 0
    %174 = vmatpush1.bf16.msra.mxu0 %v154
    %175 = vmatprep.subr.bf16.mxu0 0
    %176 = vmatpush1.bf16.msra.mxu0 %v153
    %177 = vmatprep.subr.bf16.mxu0 0
    %178 = vmatpush2.bf16.msra.mxu0 0
    %179 = vmatprep.subr.bf16.mxu0 0
    %180 = vmatpush2.bf16.msra.mxu0 0
    %181 = vmatprep.subr.bf16.mxu0 0
    %182 = vmatpush2.bf16.msra.mxu0 0
    %183 = vmatprep.subr.bf16.mxu0 0
    %184 = vmatpush2.bf16.msra.mxu0 0
    %185 = vmatprep.subr.bf16.mxu0 0
    %186 = vmatpush2.bf16.msra.mxu0 0
    %187 = vmatprep.subr.bf16.mxu0 0
    %188 = vmatpush2.bf16.msra.mxu0 0
    %189 = vmatprep.subr.bf16.mxu0 0
    %190 = vmatpush2.bf16.msra.mxu0 0
    %191 = vmatprep.subr.bf16.mxu0 0
    %192 = vmatpush2.bf16.msra.mxu0 0
    %193 = vmatprep.mubr.bf16.mxu0 0
    %194 = vmatmul.mubr.bf16.gmra.mxu0 %v159
    %v195 = vpop.f32.mrf.mxu0
    %v196 = vadd.f32 %v143, %v195
    %v197 = vpop.f32.mrf.mxu0
    %v198 = vpop.f32.mrf.mxu0
    %v199 = vpop.f32.mrf.mxu0
    %200 = vdwg.mxu0
    %v201 = vmax.f32 %v196, 0.0
    %v202 = vld [vmem:[#allocation6] sm:$0xf]
    %v203 = vld [vmem:[#allocation6 + $0x4] sm:$0xf]
    %v204 = vld [vmem:[#allocation6 + $0x8] sm:$0xf]
    %v205 = vld [vmem:[#allocation6 + $0xc] sm:$0xf]
    %v206 = vld [vmem:[#allocation6 + $0x10] sm:$0xf]
    %v207 = vld [vmem:[#allocation6 + $0x14] sm:$0xf]
    %v208 = vld [vmem:[#allocation6 + $0x18] sm:$0xf]
    %v209 = vld [vmem:[#allocation6 + $0x1c] sm:$0xf]
    %v210 = vld [vmem:[#allocation6 + $0x20] sm:$0xf]
    %v211 = vld [vmem:[#allocation6 + $0x24] sm:$0xf]
    %v212 = vld [vmem:[#allocation6 + $0x28] sm:$0xf]
    %v213 = vld [vmem:[#allocation6 + $0x2c] sm:$0xf]
    %v214 = vld [vmem:[#allocation6 + $0x30] sm:$0xf]
    %v215 = vld [vmem:[#allocation6 + $0x34] sm:$0xf]
    %v216 = vld [vmem:[#allocation6 + $0x38] sm:$0xf]
    %v217 = vld [vmem:[#allocation6 + $0x3c] sm:$0xf]
    %v218 = vld [vmem:[%s5] sm:$0x1]
    %v219 = vpack.c.bf16 %v201, %v201
    %v221 = vlaneseq
    %v222 = vshrl.u32 %v221, 7
    %v223 = vsub.s32 0, %v222
    %v224 = vrot.slane %v218, %v223
    %v242 = vunpack.c.l.b16 %v202
    %v243 = vunpack.c.l.b16 %v203
    %v244 = vunpack.c.l.b16 %v204
    %v245 = vunpack.c.l.b16 %v205
    %v246 = vunpack.c.l.b16 %v206
    %v247 = vunpack.c.l.b16 %v207
    %v248 = vunpack.c.l.b16 %v208
    %v249 = vunpack.c.l.b16 %v209
    %v250 = vunpack.c.l.b16 %v210
    %v251 = vunpack.c.l.b16 %v211
    %v252 = vunpack.c.l.b16 %v212
    %v253 = vunpack.c.l.b16 %v213
    %v254 = vunpack.c.l.b16 %v214
    %v255 = vunpack.c.l.b16 %v215
    %v256 = vunpack.c.l.b16 %v216
    %v257 = vunpack.c.l.b16 %v217
    %v258 = vpack.c.b16 %v243, %v242
    %v259 = vpack.c.b16 %v245, %v244
    %v260 = vpack.c.b16 %v247, %v246
    %v261 = vpack.c.b16 %v249, %v248
    %v262 = vpack.c.b16 %v251, %v250
    %v263 = vpack.c.b16 %v253, %v252
    %v264 = vpack.c.b16 %v255, %v254
    %v265 = vpack.c.b16 %v257, %v256
    %274 = vmatprep.subr.bf16.mxu0 0
    %275 = vmatpush1.bf16.msra.mxu0 %v265
    %276 = vmatprep.subr.bf16.mxu0 0
    %277 = vmatpush1.bf16.msra.mxu0 %v264
    %278 = vmatprep.subr.bf16.mxu0 0
    %279 = vmatpush1.bf16.msra.mxu0 %v263
    %280 = vmatprep.subr.bf16.mxu0 0
    %281 = vmatpush1.bf16.msra.mxu0 %v262
    %282 = vmatprep.subr.bf16.mxu0 0
    %283 = vmatpush1.bf16.msra.mxu0 %v261
    %284 = vmatprep.subr.bf16.mxu0 0
    %285 = vmatpush1.bf16.msra.mxu0 %v260
    %286 = vmatprep.subr.bf16.mxu0 0
    %287 = vmatpush1.bf16.msra.mxu0 %v259
    %288 = vmatprep.subr.bf16.mxu0 0
    %289 = vmatpush1.bf16.msra.mxu0 %v258
    %290 = vmatprep.subr.bf16.mxu0 0
    %291 = vmatpush2.bf16.msra.mxu0 0
    %292 = vmatprep.subr.bf16.mxu0 0
    %293 = vmatpush2.bf16.msra.mxu0 0
    %294 = vmatprep.subr.bf16.mxu0 0
    %295 = vmatpush2.bf16.msra.mxu0 0
    %296 = vmatprep.subr.bf16.mxu0 0
    %297 = vmatpush2.bf16.msra.mxu0 0
    %298 = vmatprep.subr.bf16.mxu0 0
    %299 = vmatpush2.bf16.msra.mxu0 0
    %300 = vmatprep.subr.bf16.mxu0 0
    %301 = vmatpush2.bf16.msra.mxu0 0
    %302 = vmatprep.subr.bf16.mxu0 0
    %303 = vmatpush2.bf16.msra.mxu0 0
    %304 = vmatprep.subr.bf16.mxu0 0
    %305 = vmatpush2.bf16.msra.mxu0 0
    %306 = vmatprep.mubr.bf16.mxu0 0
    %307 = vmatmul.mubr.bf16.gmra.mxu0 %v219
    %v308 = vpop.f32.mrf.mxu0
    %v309 = vadd.f32 %v224, %v308
    %v310 = vpop.f32.mrf.mxu0
    %v311 = vpop.f32.mrf.mxu0
    %v312 = vpop.f32.mrf.mxu0
    %313 = vdwg.mxu0
    %v314 = vmax.f32 %v309, 0.0
    %v315 = vld [vmem:[#allocation8] sm:$0xff]
    %v316 = vld [vmem:[#allocation8 + $0x8] sm:$0xff]
    %v317 = vld [vmem:[#allocation8 + $0x10] sm:$0xff]
    %v318 = vld [vmem:[#allocation8 + $0x18] sm:$0xff]
    %v319 = vld [vmem:[#allocation8 + $0x20] sm:$0xff]
    %v320 = vld [vmem:[#allocation8 + $0x28] sm:$0xff]
    %v321 = vld [vmem:[#allocation8 + $0x30] sm:$0xff]
    %v322 = vld [vmem:[#allocation8 + $0x38] sm:$0xff]
    %v323 = vld [vmem:[#allocation8 + $0x40] sm:$0xff]
    %v324 = vld [vmem:[#allocation8 + $0x48] sm:$0xff]
    %v325 = vld [vmem:[#allocation8 + $0x50] sm:$0xff]
    %v326 = vld [vmem:[#allocation8 + $0x58] sm:$0xff]
    %v327 = vld [vmem:[#allocation8 + $0x60] sm:$0xff]
    %v328 = vld [vmem:[#allocation8 + $0x68] sm:$0xff]
    %v329 = vld [vmem:[#allocation8 + $0x70] sm:$0xff]
    %v330 = vld [vmem:[#allocation8 + $0x78] sm:$0xff]
    %v331 = vld [vmem:[%s7] sm:$0x3]
    %v332 = vpack.c.bf16 %v314, %v314
    %v334 = vlaneseq
    %v335 = vshrl.u32 %v334, 7
    %v336 = vsub.s32 0, %v335
    %v337 = vrot.slane %v331, %v336
    %v338 = vlaneseq
    %v339 = vshrl.u32 %v338, 7
    %v340 = vsub.s32 1, %v339
    %v341 = vrot.slane %v331, %v340
    %v360 = vunpack.c.l.b16 %v315
    %v361 = vunpack.c.h.b16 %v315
    %v362 = vunpack.c.l.b16 %v316
    %v363 = vunpack.c.h.b16 %v316
    %v364 = vunpack.c.l.b16 %v317
    %v365 = vunpack.c.h.b16 %v317
    %v366 = vunpack.c.l.b16 %v318
    %v367 = vunpack.c.h.b16 %v318
    %v368 = vunpack.c.l.b16 %v319
    %v369 = vunpack.c.h.b16 %v319
    %v370 = vunpack.c.l.b16 %v320
    %v371 = vunpack.c.h.b16 %v320
    %v372 = vunpack.c.l.b16 %v321
    %v373 = vunpack.c.h.b16 %v321
    %v374 = vunpack.c.l.b16 %v322
    %v375 = vunpack.c.h.b16 %v322
    %v376 = vunpack.c.l.b16 %v323
    %v377 = vunpack.c.h.b16 %v323
    %v378 = vunpack.c.l.b16 %v324
    %v379 = vunpack.c.h.b16 %v324
    %v380 = vunpack.c.l.b16 %v325
    %v381 = vunpack.c.h.b16 %v325
    %v382 = vunpack.c.l.b16 %v326
    %v383 = vunpack.c.h.b16 %v326
    %v384 = vunpack.c.l.b16 %v327
    %v385 = vunpack.c.h.b16 %v327
    %v386 = vunpack.c.l.b16 %v328
    %v387 = vunpack.c.h.b16 %v328
    %v388 = vunpack.c.l.b16 %v329
    %v389 = vunpack.c.h.b16 %v329
    %v390 = vunpack.c.l.b16 %v330
    %v391 = vunpack.c.h.b16 %v330
    %v392 = vpack.c.b16 %v362, %v360
    %v393 = vpack.c.b16 %v363, %v361
    %v394 = vpack.c.b16 %v366, %v364
    %v395 = vpack.c.b16 %v367, %v365
    %v396 = vpack.c.b16 %v370, %v368
    %v397 = vpack.c.b16 %v371, %v369
    %v398 = vpack.c.b16 %v374, %v372
    %v399 = vpack.c.b16 %v375, %v373
    %v400 = vpack.c.b16 %v378, %v376
    %v401 = vpack.c.b16 %v379, %v377
    %v402 = vpack.c.b16 %v382, %v380
    %v403 = vpack.c.b16 %v383, %v381
    %v404 = vpack.c.b16 %v386, %v384
    %v405 = vpack.c.b16 %v387, %v385
    %v406 = vpack.c.b16 %v390, %v388
    %v407 = vpack.c.b16 %v391, %v389
    %424 = vmatprep.subr.bf16.mxu0 %v407
    %425 = vmatpush1.bf16.msra.mxu0 %v406
    %426 = vmatprep.subr.bf16.mxu0 %v405
    %427 = vmatpush1.bf16.msra.mxu0 %v404
    %428 = vmatprep.subr.bf16.mxu0 %v403
    %429 = vmatpush1.bf16.msra.mxu0 %v402
    %430 = vmatprep.subr.bf16.mxu0 %v401
    %431 = vmatpush1.bf16.msra.mxu0 %v400
    %432 = vmatprep.subr.bf16.mxu0 %v399
    %433 = vmatpush1.bf16.msra.mxu0 %v398
    %434 = vmatprep.subr.bf16.mxu0 %v397
    %435 = vmatpush1.bf16.msra.mxu0 %v396
    %436 = vmatprep.subr.bf16.mxu0 %v395
    %437 = vmatpush1.bf16.msra.mxu0 %v394
    %438 = vmatprep.subr.bf16.mxu0 %v393
    %439 = vmatpush1.bf16.msra.mxu0 %v392
    %440 = vmatprep.subr.bf16.mxu0 0
    %441 = vmatpush2.bf16.msra.mxu0 0
    %442 = vmatprep.subr.bf16.mxu0 0
    %443 = vmatpush2.bf16.msra.mxu0 0
    %444 = vmatprep.subr.bf16.mxu0 0
    %445 = vmatpush2.bf16.msra.mxu0 0
    %446 = vmatprep.subr.bf16.mxu0 0
    %447 = vmatpush2.bf16.msra.mxu0 0
    %448 = vmatprep.subr.bf16.mxu0 0
    %449 = vmatpush2.bf16.msra.mxu0 0
    %450 = vmatprep.subr.bf16.mxu0 0
    %451 = vmatpush2.bf16.msra.mxu0 0
    %452 = vmatprep.subr.bf16.mxu0 0
    %453 = vmatpush2.bf16.msra.mxu0 0
    %454 = vmatprep.subr.bf16.mxu0 0
    %455 = vmatpush2.bf16.msra.mxu0 0
    %456 = vmatprep.mubr.bf16.mxu0 0
    %457 = vmatmul.mubr.bf16.gmra.mxu0 %v332
    %v458 = vpop.f32.mrf.mxu0
    %v459 = vadd.f32 %v337, %v458
    %v460 = vpop.f32.mrf.mxu0
    %v461 = vadd.f32 %v341, %v460
    %v462 = vpop.f32.mrf.mxu0
    %v463 = vpop.f32.mrf.mxu0
    %464 = vdwg.mxu0
    %v465 = vmul.f32 %v461, 0.5
    %v466 = vmul.f32 %v465, 1.442695
    %v467 = vpow.pop %v466
    %v468 = vld [vmem:[%s1] sm:$0xff]
    %v469 = vmul.f32 %v467, %v468
    %v470 = vadd.f32 %v459, %v469
    %v471 = vadd.f32 %v461, 1.0
    %v472 = vmul.f32 %v459, %v459
    %v473 = vsub.f32 %v471, %v472
    %v474 = vmul.f32 %v467, %v467
    %v475 = vsub.f32 %v473, %v474
    %v476 = vmul.f32 %v475, -0.5
    %477 = vadd.xlane.f32.xlu0 %v476
    %v478 = vpop.xlane.xlu0 %477
    %v479 = vrot.slane %v478, 4
    %v480 = vadd.f32 %v478, %v479
    %v481 = vrot.slane %v480, 2
    %v482 = vadd.f32 %v480, %v481
    %v483 = vrot.slane %v482, 1
    %v484 = vadd.f32 %v482, %v483
    %s485 = vtos %v484
    %s486 = smul.f32 %s485, 0.125
    %s487 = scalar_lea.smem [#allocation15], 0
    %488 = sst [smem:[%s487]] %s486
    %v489 = vld [vmem:[#allocation9] sm:$0xf]
    %v490 = vld [vmem:[#allocation9 + $0x4] sm:$0xf]
    %v491 = vld [vmem:[#allocation9 + $0x8] sm:$0xf]
    %v492 = vld [vmem:[#allocation9 + $0xc] sm:$0xf]
    %v493 = vld [vmem:[#allocation9 + $0x10] sm:$0xf]
    %v494 = vld [vmem:[#allocation9 + $0x14] sm:$0xf]
    %v495 = vld [vmem:[#allocation9 + $0x18] sm:$0xf]
    %v496 = vld [vmem:[#allocation9 + $0x1c] sm:$0xf]
    %v497 = vld [vmem:[#allocation9 + $0x20] sm:$0xf]
    %v498 = vld [vmem:[#allocation9 + $0x24] sm:$0xf]
    %v499 = vld [vmem:[#allocation9 + $0x28] sm:$0xf]
    %v500 = vld [vmem:[#allocation9 + $0x2c] sm:$0xf]
    %v501 = vld [vmem:[#allocation9 + $0x30] sm:$0xf]
    %v502 = vld [vmem:[#allocation9 + $0x34] sm:$0xf]
    %v503 = vld [vmem:[#allocation9 + $0x38] sm:$0xf]
    %v504 = vld [vmem:[#allocation9 + $0x3c] sm:$0xf]
    %v505 = vld [vmem:[%s9] sm:$0x1]
    %v506 = vpack.c.bf16 %v470, %v470
    %v508 = vlaneseq
    %v509 = vshrl.u32 %v508, 7
    %v510 = vsub.s32 0, %v509
    %v511 = vrot.slane %v505, %v510
    %v529 = vunpack.c.l.b16 %v489
    %v530 = vunpack.c.l.b16 %v490
    %v531 = vunpack.c.l.b16 %v491
    %v532 = vunpack.c.l.b16 %v492
    %v533 = vunpack.c.l.b16 %v493
    %v534 = vunpack.c.l.b16 %v494
    %v535 = vunpack.c.l.b16 %v495
    %v536 = vunpack.c.l.b16 %v496
    %v537 = vunpack.c.l.b16 %v497
    %v538 = vunpack.c.l.b16 %v498
    %v539 = vunpack.c.l.b16 %v499
    %v540 = vunpack.c.l.b16 %v500
    %v541 = vunpack.c.l.b16 %v501
    %v542 = vunpack.c.l.b16 %v502
    %v543 = vunpack.c.l.b16 %v503
    %v544 = vunpack.c.l.b16 %v504
    %v545 = vpack.c.b16 %v530, %v529
    %v546 = vpack.c.b16 %v532, %v531
    %v547 = vpack.c.b16 %v534, %v533
    %v548 = vpack.c.b16 %v536, %v535
    %v549 = vpack.c.b16 %v538, %v537
    %v550 = vpack.c.b16 %v540, %v539
    %v551 = vpack.c.b16 %v542, %v541
    %v552 = vpack.c.b16 %v544, %v543
    %561 = vmatprep.subr.bf16.mxu0 0
    %562 = vmatpush1.bf16.msra.mxu0 %v552
    %563 = vmatprep.subr.bf16.mxu0 0
    %564 = vmatpush1.bf16.msra.mxu0 %v551
    %565 = vmatprep.subr.bf16.mxu0 0
    %566 = vmatpush1.bf16.msra.mxu0 %v550
    %567 = vmatprep.subr.bf16.mxu0 0
    %568 = vmatpush1.bf16.msra.mxu0 %v549
    %569 = vmatprep.subr.bf16.mxu0 0
    %570 = vmatpush1.bf16.msra.mxu0 %v548
    %571 = vmatprep.subr.bf16.mxu0 0
    %572 = vmatpush1.bf16.msra.mxu0 %v547
    %573 = vmatprep.subr.bf16.mxu0 0
    %574 = vmatpush1.bf16.msra.mxu0 %v546
    %575 = vmatprep.subr.bf16.mxu0 0
    %576 = vmatpush1.bf16.msra.mxu0 %v545
    %577 = vmatprep.subr.bf16.mxu0 0
    %578 = vmatpush2.bf16.msra.mxu0 0
    %579 = vmatprep.subr.bf16.mxu0 0
    %580 = vmatpush2.bf16.msra.mxu0 0
    %581 = vmatprep.subr.bf16.mxu0 0
    %582 = vmatpush2.bf16.msra.mxu0 0
    %583 = vmatprep.subr.bf16.mxu0 0
    %584 = vmatpush2.bf16.msra.mxu0 0
    %585 = vmatprep.subr.bf16.mxu0 0
    %586 = vmatpush2.bf16.msra.mxu0 0
    %587 = vmatprep.subr.bf16.mxu0 0
    %588 = vmatpush2.bf16.msra.mxu0 0
    %589 = vmatprep.subr.bf16.mxu0 0
    %590 = vmatpush2.bf16.msra.mxu0 0
    %591 = vmatprep.subr.bf16.mxu0 0
    %592 = vmatpush2.bf16.msra.mxu0 0
    %593 = vmatprep.mubr.bf16.mxu0 0
    %594 = vmatmul.mubr.bf16.gmra.mxu0 %v506
    %v595 = vpop.f32.mrf.mxu0
    %v596 = vadd.f32 %v511, %v595
    %v597 = vpop.f32.mrf.mxu0
    %v598 = vpop.f32.mrf.mxu0
    %v599 = vpop.f32.mrf.mxu0
    %600 = vdwg.mxu0
    %v601 = vmax.f32 %v596, 0.0
    %v602 = vld [vmem:[#allocation11] sm:$0xf]
    %v603 = vld [vmem:[#allocation11 + $0x4] sm:$0xf]
    %v604 = vld [vmem:[#allocation11 + $0x8] sm:$0xf]
    %v605 = vld [vmem:[#allocation11 + $0xc] sm:$0xf]
    %v606 = vld [vmem:[#allocation11 + $0x10] sm:$0xf]
    %v607 = vld [vmem:[#allocation11 + $0x14] sm:$0xf]
    %v608 = vld [vmem:[#allocation11 + $0x18] sm:$0xf]
    %v609 = vld [vmem:[#allocation11 + $0x1c] sm:$0xf]
    %v610 = vld [vmem:[#allocation11 + $0x20] sm:$0xf]
    %v611 = vld [vmem:[#allocation11 + $0x24] sm:$0xf]
    %v612 = vld [vmem:[#allocation11 + $0x28] sm:$0xf]
    %v613 = vld [vmem:[#allocation11 + $0x2c] sm:$0xf]
    %v614 = vld [vmem:[#allocation11 + $0x30] sm:$0xf]
    %v615 = vld [vmem:[#allocation11 + $0x34] sm:$0xf]
    %v616 = vld [vmem:[#allocation11 + $0x38] sm:$0xf]
    %v617 = vld [vmem:[#allocation11 + $0x3c] sm:$0xf]
    %v618 = vld [vmem:[%s11] sm:$0x1]
    %v619 = vpack.c.bf16 %v601, %v601
    %v621 = vlaneseq
    %v622 = vshrl.u32 %v621, 7
    %v623 = vsub.s32 0, %v622
    %v624 = vrot.slane %v618, %v623
    %v642 = vunpack.c.l.b16 %v602
    %v643 = vunpack.c.l.b16 %v603
    %v644 = vunpack.c.l.b16 %v604
    %v645 = vunpack.c.l.b16 %v605
    %v646 = vunpack.c.l.b16 %v606
    %v647 = vunpack.c.l.b16 %v607
    %v648 = vunpack.c.l.b16 %v608
    %v649 = vunpack.c.l.b16 %v609
    %v650 = vunpack.c.l.b16 %v610
    %v651 = vunpack.c.l.b16 %v611
    %v652 = vunpack.c.l.b16 %v612
    %v653 = vunpack.c.l.b16 %v613
    %v654 = vunpack.c.l.b16 %v614
    %v655 = vunpack.c.l.b16 %v615
    %v656 = vunpack.c.l.b16 %v616
    %v657 = vunpack.c.l.b16 %v617
    %v658 = vpack.c.b16 %v643, %v642
    %v659 = vpack.c.b16 %v645, %v644
    %v660 = vpack.c.b16 %v647, %v646
    %v661 = vpack.c.b16 %v649, %v648
    %v662 = vpack.c.b16 %v651, %v650
    %v663 = vpack.c.b16 %v653, %v652
    %v664 = vpack.c.b16 %v655, %v654
    %v665 = vpack.c.b16 %v657, %v656
    %674 = vmatprep.subr.bf16.mxu0 0
    %675 = vmatpush1.bf16.msra.mxu0 %v665
    %676 = vmatprep.subr.bf16.mxu0 0
    %677 = vmatpush1.bf16.msra.mxu0 %v664
    %678 = vmatprep.subr.bf16.mxu0 0
    %679 = vmatpush1.bf16.msra.mxu0 %v663
    %680 = vmatprep.subr.bf16.mxu0 0
    %681 = vmatpush1.bf16.msra.mxu0 %v662
    %682 = vmatprep.subr.bf16.mxu0 0
    %683 = vmatpush1.bf16.msra.mxu0 %v661
    %684 = vmatprep.subr.bf16.mxu0 0
    %685 = vmatpush1.bf16.msra.mxu0 %v660
    %686 = vmatprep.subr.bf16.mxu0 0
    %687 = vmatpush1.bf16.msra.mxu0 %v659
    %688 = vmatprep.subr.bf16.mxu0 0
    %689 = vmatpush1.bf16.msra.mxu0 %v658
    %690 = vmatprep.subr.bf16.mxu0 0
    %691 = vmatpush2.bf16.msra.mxu0 0
    %692 = vmatprep.subr.bf16.mxu0 0
    %693 = vmatpush2.bf16.msra.mxu0 0
    %694 = vmatprep.subr.bf16.mxu0 0
    %695 = vmatpush2.bf16.msra.mxu0 0
    %696 = vmatprep.subr.bf16.mxu0 0
    %697 = vmatpush2.bf16.msra.mxu0 0
    %698 = vmatprep.subr.bf16.mxu0 0
    %699 = vmatpush2.bf16.msra.mxu0 0
    %700 = vmatprep.subr.bf16.mxu0 0
    %701 = vmatpush2.bf16.msra.mxu0 0
    %702 = vmatprep.subr.bf16.mxu0 0
    %703 = vmatpush2.bf16.msra.mxu0 0
    %704 = vmatprep.subr.bf16.mxu0 0
    %705 = vmatpush2.bf16.msra.mxu0 0
    %706 = vmatprep.mubr.bf16.mxu0 0
    %707 = vmatmul.mubr.bf16.gmra.mxu0 %v619
    %v708 = vpop.f32.mrf.mxu0
    %v709 = vadd.f32 %v624, %v708
    %v710 = vpop.f32.mrf.mxu0
    %v711 = vpop.f32.mrf.mxu0
    %v712 = vpop.f32.mrf.mxu0
    %713 = vdwg.mxu0
    %v714 = vmax.f32 %v709, 0.0
    %v715 = vld [vmem:[#allocation12] sm:$0xf]
    %v716 = vld [vmem:[#allocation12 + $0x4] sm:$0xf]
    %v717 = vld [vmem:[#allocation12 + $0x8] sm:$0xf]
    %v718 = vld [vmem:[#allocation12 + $0xc] sm:$0xf]
    %v719 = vld [vmem:[#allocation12 + $0x10] sm:$0xf]
    %v720 = vld [vmem:[#allocation12 + $0x14] sm:$0xf]
    %v721 = vld [vmem:[#allocation12 + $0x18] sm:$0xf]
    %v722 = vld [vmem:[#allocation12 + $0x1c] sm:$0xf]
    %v723 = vld [vmem:[#allocation12 + $0x20] sm:$0xf]
    %v724 = vld [vmem:[#allocation12 + $0x24] sm:$0xf]
    %v725 = vld [vmem:[#allocation12 + $0x28] sm:$0xf]
    %v726 = vld [vmem:[#allocation12 + $0x2c] sm:$0xf]
    %v727 = vld [vmem:[#allocation12 + $0x30] sm:$0xf]
    %v728 = vld [vmem:[#allocation12 + $0x34] sm:$0xf]
    %v729 = vld [vmem:[#allocation12 + $0x38] sm:$0xf]
    %v730 = vld [vmem:[#allocation12 + $0x3c] sm:$0xf]
    %v731 = vld [vmem:[%s13] sm:$0x1]
    %v732 = vpack.c.bf16 %v714, %v714
    %v734 = vlaneseq
    %v735 = vshrl.u32 %v734, 7
    %v736 = vsub.s32 0, %v735
    %v737 = vrot.slane %v731, %v736
    %v755 = vunpack.c.l.b16 %v715
    %v756 = vunpack.c.l.b16 %v716
    %v757 = vunpack.c.l.b16 %v717
    %v758 = vunpack.c.l.b16 %v718
    %v759 = vunpack.c.l.b16 %v719
    %v760 = vunpack.c.l.b16 %v720
    %v761 = vunpack.c.l.b16 %v721
    %v762 = vunpack.c.l.b16 %v722
    %v763 = vunpack.c.l.b16 %v723
    %v764 = vunpack.c.l.b16 %v724
    %v765 = vunpack.c.l.b16 %v725
    %v766 = vunpack.c.l.b16 %v726
    %v767 = vunpack.c.l.b16 %v727
    %v768 = vunpack.c.l.b16 %v728
    %v769 = vunpack.c.l.b16 %v729
    %v770 = vunpack.c.l.b16 %v730
    %v771 = vpack.c.b16 %v756, %v755
    %v772 = vpack.c.b16 %v758, %v757
    %v773 = vpack.c.b16 %v760, %v759
    %v774 = vpack.c.b16 %v762, %v761
    %v775 = vpack.c.b16 %v764, %v763
    %v776 = vpack.c.b16 %v766, %v765
    %v777 = vpack.c.b16 %v768, %v767
    %v778 = vpack.c.b16 %v770, %v769
    %787 = vmatprep.subr.bf16.mxu0 0
    %788 = vmatpush1.bf16.msra.mxu0 %v778
    %789 = vmatprep.subr.bf16.mxu0 0
    %790 = vmatpush1.bf16.msra.mxu0 %v777
    %791 = vmatprep.subr.bf16.mxu0 0
    %792 = vmatpush1.bf16.msra.mxu0 %v776
    %793 = vmatprep.subr.bf16.mxu0 0
    %794 = vmatpush1.bf16.msra.mxu0 %v775
    %795 = vmatprep.subr.bf16.mxu0 0
    %796 = vmatpush1.bf16.msra.mxu0 %v774
    %797 = vmatprep.subr.bf16.mxu0 0
    %798 = vmatpush1.bf16.msra.mxu0 %v773
    %799 = vmatprep.subr.bf16.mxu0 0
    %800 = vmatpush1.bf16.msra.mxu0 %v772
    %801 = vmatprep.subr.bf16.mxu0 0
    %802 = vmatpush1.bf16.msra.mxu0 %v771
    %803 = vmatprep.subr.bf16.mxu0 0
    %804 = vmatpush2.bf16.msra.mxu0 0
    %805 = vmatprep.subr.bf16.mxu0 0
    %806 = vmatpush2.bf16.msra.mxu0 0
    %807 = vmatprep.subr.bf16.mxu0 0
    %808 = vmatpush2.bf16.msra.mxu0 0
    %809 = vmatprep.subr.bf16.mxu0 0
    %810 = vmatpush2.bf16.msra.mxu0 0
    %811 = vmatprep.subr.bf16.mxu0 0
    %812 = vmatpush2.bf16.msra.mxu0 0
    %813 = vmatprep.subr.bf16.mxu0 0
    %814 = vmatpush2.bf16.msra.mxu0 0
    %815 = vmatprep.subr.bf16.mxu0 0
    %816 = vmatpush2.bf16.msra.mxu0 0
    %817 = vmatprep.subr.bf16.mxu0 0
    %818 = vmatpush2.bf16.msra.mxu0 0
    %819 = vmatprep.mubr.bf16.mxu0 0
    %820 = vmatmul.mubr.bf16.gmra.mxu0 %v732
    %v821 = vpop.f32.mrf.mxu0
    %v822 = vadd.f32 %v737, %v821
    %v823 = vpop.f32.mrf.mxu0
    %v824 = vpop.f32.mrf.mxu0
    %v825 = vpop.f32.mrf.mxu0
    %826 = vdwg.mxu0
    %v827 = vmax.f32 %v822, 0.0
    %828 = vst [vmem:[#allocation14] sm:$0xff] %v827
    // Predicated region
    $region82: #{fwd.1} parent=1 // pred_check
      _
    $region83: #{fwd.1} parent=1 // pred_check_branch
      %830 = sbr.rel (0) target = $region85
    $region84: #{fwd.1} parent=1 // pred_region
      %s832 = ssub.s32 128, 128
      %833 = vsyncadd [#allocation4], %s832
      %s835 = sshll.u32 [#allocation14], 4
      %s836 = int_to_ptr.vmem [resolvable:$true] %s835
      %838 = dma.vmem_to_hbm [thread:$0]  %s836, 128, %s14, [#allocation4]
    $region85: #{fwd.1} parent=1 // pred_fallthru
      _
    // Predicated region
    $region86: #{fwd.1} parent=1 // pred_check
      _
    $region87: #{fwd.1} parent=1 // pred_check_branch
      %840 = sbr.rel (0) target = $region89
    $region88: #{fwd.1} parent=1 // pred_region
      %s842 = ssub.s32 16, 16
      %843 = vsyncadd [#allocation5], %s842
      %846 = dma.smem_to_hbm [#allocation15], 16, %s15, [#allocation5]
    $region89: #{fwd.1} parent=1 // pred_fallthru
      _
    // Predicated region
    $region90: #{fwd.1} parent=1 // pred_check
      _
    $region91: #{fwd.1} parent=1 // pred_check_branch
      %848 = sbr.rel (0) target = $region93
    $region92: #{fwd.1} parent=1 // pred_region
      %849 = dma.done [#allocation4], 128
    $region93: #{fwd.1} parent=1 // pred_fallthru
      _
    // Predicated region
    $region94: #{fwd.1} parent=1 // pred_check
      _
    $region95: #{fwd.1} parent=1 // pred_check_branch
      %851 = sbr.rel (0) target = $region97
    $region96: #{fwd.1} parent=1 // pred_region
      %852 = dma.done [#allocation5], 16
    $region97: #{fwd.1} parent=1 // pred_fallthru
      _
    %853 = sfence
    %854 = vsyncpa [#allocation3], 1
    %855 = vsyncpa [#allocation7], 1
    %856 = vsyncpa [#allocation10], 1
    %857 = vsyncpa [#allocation13], 1
    %858 = vsyncpa [#allocation4], 1
    %859 = vsyncpa [#allocation5], 1

</llo_original>
